<compile_context>
chip_gen: v6e
topology: v6e:2x2x1
jax: 0.10.0
libtpu: 0.0.40
codegen_flags: <defaults>
</compile_context>

<pallas_src>
import functools

import jax
import jax.numpy as jnp
from jax.experimental import pallas as pl
from jax.experimental.pallas import tpu as pltpu


def _swish_kernel(x_ref, o_ref, *, beta):
    # x_ref / o_ref: (TR, COLS) VMEM tiles. Purely elementwise (VPU + EUP).
    x = x_ref[...]
    xf = x.astype(jnp.float32)
    y = xf * jax.nn.sigmoid(beta * xf)
    o_ref[...] = y.astype(o_ref.dtype)


def swish(x, beta=1.12, *, tile_rows=512, cols=1024):
    """Elementwise swish via a Pallas TPU kernel. Works for any shape/dtype."""
    orig_shape = x.shape
    n = x.size

    # Lane-dense slab: wide last dim (multiple of 128). Fall back to 128 lanes
    # for tiny inputs so we don't pad more than necessary.
    if n < cols:
        cols = 128

    n_pad = pl.cdiv(n, cols) * cols
    x_flat = x.reshape(-1)
    padded = n_pad != n
    if padded:
        # Zero-pad is safe for swish (0 * sigmoid(0) == 0) and sliced off below.
        x_flat = jnp.pad(x_flat, (0, n_pad - n))

    rows = n_pad // cols
    x2d = x_flat.reshape(rows, cols)

    # Row-tile: 512 keeps f32 tiles at 2 MiB (fits every generation's default
    # scoped VMEM with double-buffered in+out) and is a multiple of 8/16/32,
    # so f32 / bf16 / int8 sublane packing is all happy. For small inputs use
    # the full row extent (always a legal block shape).
    tr = tile_rows if rows >= tile_rows else rows
    grid = (pl.cdiv(rows, tr),)

    kernel = functools.partial(_swish_kernel, beta=float(beta))

    out2d = pl.pallas_call(
        kernel,
        out_shape=jax.ShapeDtypeStruct((rows, cols), x2d.dtype),
        grid_spec=pl.GridSpec(
            grid=grid,
            in_specs=[pl.BlockSpec((tr, cols), lambda i: (i, 0))],
            out_specs=pl.BlockSpec((tr, cols), lambda i: (i, 0)),
        ),
        compiler_params=pltpu.CompilerParams(
            dimension_semantics=("parallel",),
        ),
    )(x2d)

    out_flat = out2d.reshape(-1)
    if padded:
        out_flat = out_flat[:n]
    return out_flat.reshape(orig_shape)


if __name__ == "__main__":
    key = jax.random.PRNGKey(0)
    # Shape consistent with a typical NCHW activation tensor
    x = jax.random.normal(key, (2, 4, 16, 16), dtype=jnp.float32)

    y = swish(x, beta=1.12)
    y = jax.block_until_ready(y)

    # Reference check against plain JAX
    y_ref = x * jax.nn.sigmoid(1.12 * x)
    assert y.shape == x.shape and y.dtype == x.dtype
    assert jnp.allclose(y, y_ref, atol=1e-6, rtol=1e-6)

    print("KERNEL_OK")
</pallas_src>

<mosaic_0001>
module attributes {stable_mosaic.version = 11 : i64} {
  func.func @_swish_kernel(%arg0: i32, %arg1: memref<2x1024xf32, #tpu.memory_space<vmem>>, %arg2: memref<2x1024xf32, #tpu.memory_space<vmem>>) attributes {dimension_semantics = [#tpu.dimension_semantics<parallel>], iteration_bounds = array<i64: 1>, scalar_prefetch = 0 : i64, scratch_operands = 0 : i64, tpu.core_type = #tpu.core_type<tc>, window_params = [{transform_indices = @transform_0, window_bounds = array<i64: 2, 1024>}, {transform_indices = @transform_1, window_bounds = array<i64: 2, 1024>}]} {
    %c0 = arith.constant 0 : index
    %c0_0 = arith.constant 0 : index
    %0 = vector.load %arg1[%c0, %c0_0] : memref<2x1024xf32, #tpu.memory_space<vmem>>, vector<2x1024xf32>
    %cst = arith.constant 1.120000e+00 : f32
    %1 = vector.broadcast %cst : f32 to vector<2x1024xf32>
    %2 = arith.mulf %1, %0 : vector<2x1024xf32>
    %3 = arith.negf %2 : vector<2x1024xf32>
    %4 = math.exp %3 : vector<2x1024xf32>
    %cst_1 = arith.constant 1.000000e+00 : f32
    %5 = vector.broadcast %cst_1 : f32 to vector<2x1024xf32>
    %6 = arith.addf %5, %4 : vector<2x1024xf32>
    %7 = arith.divf %5, %6 : vector<2x1024xf32>
    %8 = arith.mulf %0, %7 : vector<2x1024xf32>
    %c0_2 = arith.constant 0 : index
    %c0_3 = arith.constant 0 : index
    %9 = vector.load %arg2[%c0_2, %c0_3] : memref<2x1024xf32, #tpu.memory_space<vmem>>, vector<2x1024xf32>
    tpu.vector_store %arg2[%c0_2, %c0_3], %8 {strides = array<i32>} : memref<2x1024xf32, #tpu.memory_space<vmem>>, vector<2x1024xf32>,
    return
  }
  func.func @transform_0(%arg0: i32) -> (i32, i32) {
    %c0_i32 = arith.constant 0 : i32
    %c0_i32_0 = arith.constant 0 : i32
    return %arg0, %c0_i32 : i32, i32
  }
  func.func @transform_1(%arg0: i32) -> (i32, i32) {
    %c0_i32 = arith.constant 0 : i32
    %c0_i32_0 = arith.constant 0 : i32
    return %arg0, %c0_i32 : i32, i32
  }
}

</mosaic_0001>

<llo_original>
// kernel: tpu_custom_call.1
$region0: #{tpu_custom_call.1}
  #allocation0 [shape = 'u32[]', space=smem, size = 0x4, offset = 0x4, fixed_abs, tag = 'smem constant byte address 0x4 - core index']
  #allocation1 [shape = 'u32[144,128]{1,0:T(1,128)}', space=vmem, size = 0x12000, scoped, tag = 'internal scratch']
  %s0 = inlined_call_operand.hbm [shape: f32[2,1024], index: 0, kind: input, shape index: {}]
  %s1 = inlined_call_operand.hbm [shape: f32[2,1024], index: 1, kind: output, shape index: {}]
  %s2 = sld [smem:[#allocation0]]
  $region18: #{tpu_custom_call.1} parent=0
    _
  %s4 = ssub.s32 1, %s2
  %s5 = scalar_select 0, %s4, %s2
  $region1: #{tpu_custom_call.1} parent=0
    #allocation2 [shape = 'u8[8192]{0}', space=vmem, size = 0x2000, scoped, tag = 'input window, operand 0, single buffered']
    #allocation3 [shape = 's32[1]{0}', space=sflag, size = 0x4, scoped, tag = 'scoped memory for tpu_custom_call.1']
    #allocation4 [shape = 's32[1]{0}', space=sflag, size = 0x4, scoped, tag = 'scoped memory for tpu_custom_call.1']
    #allocation5 [shape = 'u8[8192]{0}', space=vmem, size = 0x2000, scoped, tag = 'output window, operand 0, single buffered']
    %6 = vsyncpa [#allocation3], 0
    %7 = vsyncpa [#allocation4], 0
    // Predicated region
    $region2: #{tpu_custom_call.1} parent=1 // pred_check
      _
    $region3: #{tpu_custom_call.1} parent=1 // pred_check_branch
      %9 = sbr.rel (0) target = $region5
    $region4: #{tpu_custom_call.1} parent=1 // pred_region
      %s11 = ssub.s32 256, 256
      %12 = vsyncadd [#allocation3], %s11
      %s14 = sshll.u32 [#allocation2], 4
      %s15 = int_to_ptr.vmem [resolvable:$true] %s14
      %17 = dma.hbm_to_vmem [thread:$0]  %s0, 256, %s15, [#allocation3]
    $region5: #{tpu_custom_call.1} parent=1 // pred_fallthru
      _
    // Predicated region
    $region6: #{tpu_custom_call.1} parent=1 // pred_check
      _
    $region7: #{tpu_custom_call.1} parent=1 // pred_check_branch
      %19 = sbr.rel (0) target = $region9
    $region8: #{tpu_custom_call.1} parent=1 // pred_region
      %20 = dma.done [#allocation3], 256
    $region9: #{tpu_custom_call.1} parent=1 // pred_fallthru
      _
    %v21 = vld [vmem:[#allocation2] sm:$0xff]
    %v22 = vld [vmem:[#allocation2 + $0x8] sm:$0xff]
    %v23 = vmul.f32 %v21, 1.12
    %v24 = vmul.f32 %v22, 1.12
    %v25 = vxor.u32 %v23, 2147483648
    %v26 = vxor.u32 %v24, 2147483648
    %v27 = vmul.f32 %v25, 1.442695
    %v28 = vpow.pop %v27
    %v29 = vmul.f32 %v26, 1.442695
    %v30 = vpow.pop %v29
    %v31 = vadd.f32 %v28, 1.0
    %v32 = vadd.f32 %v30, 1.0
    %v33 = vrcp.pop %v31
    %v34 = vmul.f32 1.0, %v33
    %v35 = vrcp.pop %v32
    %v36 = vmul.f32 1.0, %v35
    %v37 = vmul.f32 %v21, %v34
    %v38 = vmul.f32 %v22, %v36
    %39 = vst [vmem:[#allocation5] sm:$0xff] %v37
    %40 = vst [vmem:[#allocation5 + $0x8] sm:$0xff] %v38
    // Predicated region
    $region10: #{tpu_custom_call.1} parent=1 // pred_check
      _
    $region11: #{tpu_custom_call.1} parent=1 // pred_check_branch
      %42 = sbr.rel (0) target = $region13
    $region12: #{tpu_custom_call.1} parent=1 // pred_region
      %s44 = ssub.s32 256, 256
      %45 = vsyncadd [#allocation4], %s44
      %s47 = sshll.u32 [#allocation5], 4
      %s48 = int_to_ptr.vmem [resolvable:$true] %s47
      %50 = dma.vmem_to_hbm [thread:$0]  %s48, 256, %s1, [#allocation4]
    $region13: #{tpu_custom_call.1} parent=1 // pred_fallthru
      _
    // Predicated region
    $region14: #{tpu_custom_call.1} parent=1 // pred_check
      _
    $region15: #{tpu_custom_call.1} parent=1 // pred_check_branch
      %52 = sbr.rel (0) target = $region17
    $region16: #{tpu_custom_call.1} parent=1 // pred_region
      %53 = dma.done [#allocation4], 256
    $region17: #{tpu_custom_call.1} parent=1 // pred_fallthru
      _
    %54 = vsyncpa [#allocation3], 1
    %55 = vsyncpa [#allocation4], 1

</llo_original>
